<compile_context>
chip_gen: v6e
topology: v6e:2x2x1
jax: 0.10.0
libtpu: 0.0.40
codegen_flags: <defaults>
</compile_context>

<pallas_src>
import math

import jax
import jax.numpy as jnp
from jax.experimental import pallas as pl
from jax.experimental.pallas import tpu as pltpu


def _round_up(x, m):
    return ((x + m - 1) // m) * m


def _bernoulli_layer_kernel(x_ref, w_ref, b_ref, logits_ref, probs_ref, acc_ref):
    # x_ref:      (tm, tk)  bf16 VMEM
    # w_ref:      (tk, tn)  bf16 VMEM
    # b_ref:      (1,  tn)  f32  VMEM
    # logits_ref: (tm, tn)  f32  VMEM (resident across k)
    # probs_ref:  (tm, tn)  bf16 VMEM (resident across k)
    # acc_ref:    (tm, tn)  f32  VMEM scratch accumulator
    k = pl.program_id(2)

    @pl.when(k == 0)
    def _init():
        acc_ref[...] = jnp.zeros_like(acc_ref)

    acc_ref[...] += jnp.dot(
        x_ref[...], w_ref[...], preferred_element_type=jnp.float32
    )

    @pl.when(k == pl.num_programs(2) - 1)
    def _finalize():
        logits = acc_ref[...] + b_ref[...]  # bias broadcast over batch rows
        logits_ref[...] = logits.astype(logits_ref.dtype)
        # Bernoulli(logits=p).probs == sigmoid(p)
        probs_ref[...] = jax.nn.sigmoid(logits).astype(probs_ref.dtype)


def bernoulli_layer(x, weight_t, bias, *, tm=256, tn=512, tk=512):
    """Returns (logits, probs) parameterizing Independent(Bernoulli(logits), x.ndim-1).

    x:        (B, Fin) float
    weight_t: (Fin, Fout) float   (transpose of PyTorch nn.Linear weight)
    bias:     (Fout,) float
    """
    B, Fin = x.shape
    Fin_w, Fout = weight_t.shape
    assert Fin_w == Fin

    # Clamp tile sizes to the padded problem; keep sublane dims multiples of 16
    # (bf16 packing) and lane dims multiples of 128 (lane-dense stores).
    tm = min(tm, _round_up(B, 16))
    tk = min(tk, _round_up(Fin, 128))
    tn = min(tn, _round_up(Fout, 128))

    B_pad = _round_up(B, tm)
    Fin_pad = _round_up(Fin, tk)
    Fout_pad = _round_up(Fout, tn)

    # Zero-pad + cast the streamed operands to bf16 (f32 accumulation in-kernel).
    x_p = jnp.zeros((B_pad, Fin_pad), jnp.bfloat16).at[:B, :Fin].set(
        x.astype(jnp.bfloat16))
    w_p = jnp.zeros((Fin_pad, Fout_pad), jnp.bfloat16).at[:Fin, :Fout].set(
        weight_t.astype(jnp.bfloat16))
    b_p = jnp.zeros((1, Fout_pad), jnp.float32).at[0, :Fout].set(
        bias.astype(jnp.float32))

    grid = (B_pad // tm, Fout_pad // tn, Fin_pad // tk)

    cost = pl.CostEstimate(
        flops=2 * B_pad * Fin_pad * Fout_pad,
        transcendentals=B_pad * Fout_pad,
        bytes_accessed=(x_p.size * 2 + w_p.size * 2 + b_p.size * 4
                        + B_pad * Fout_pad * (4 + 2)),
    )

    logits, probs = pl.pallas_call(
        _bernoulli_layer_kernel,
        out_shape=(
            jax.ShapeDtypeStruct((B_pad, Fout_pad), jnp.float32),
            jax.ShapeDtypeStruct((B_pad, Fout_pad), jnp.bfloat16),
        ),
        grid_spec=pltpu.PrefetchScalarGridSpec(
            num_scalar_prefetch=0,
            grid=grid,
            in_specs=[
                pl.BlockSpec((tm, tk), lambda m, n, k: (m, k)),
                pl.BlockSpec((tk, tn), lambda m, n, k: (k, n)),
                pl.BlockSpec((1, tn), lambda m, n, k: (0, n)),
            ],
            out_specs=(
                pl.BlockSpec((tm, tn), lambda m, n, k: (m, n)),
                pl.BlockSpec((tm, tn), lambda m, n, k: (m, n)),
            ),
            scratch_shapes=[pltpu.VMEM((tm, tn), jnp.float32)],
        ),
        compiler_params=pltpu.CompilerParams(
            dimension_semantics=("parallel", "parallel", "arbitrary"),
            vmem_limit_bytes=32 * 1024 * 1024,
        ),
        cost_estimate=cost,
    )(x_p, w_p, b_p)

    # TODO(synk): torch.distributions.Independent(Bernoulli(...)) object has no
    # Pallas equivalent; we return its defining parameters (logits, probs).
    return logits[:B, :Fout], probs[:B, :Fout]


def init_params(key, in_features, out_features):
    """Deterministic init matching BernoulliLayer.initialize().

    Weight: xavier_normal_ with gain = calculate_gain('sigmoid') == 1.0
    Bias:   nn.Linear default uniform(-1/sqrt(fan_in), 1/sqrt(fan_in))
    """
    kw, kb = jax.random.split(key)
    gain = 1.0  # torch: calculate_gain('sigmoid') == 1
    std = gain * math.sqrt(2.0 / (in_features + out_features))
    # stored already transposed: (in_features, out_features)
    weight_t = std * jax.random.normal(kw, (in_features, out_features), jnp.float32)
    bound = 1.0 / math.sqrt(in_features)
    bias = jax.random.uniform(kb, (out_features,), jnp.float32, -bound, bound)
    return weight_t, bias


if __name__ == "__main__":
    key = jax.random.PRNGKey(0)
    kx, kp = jax.random.split(key)

    # Small shapes consistent with the module (dense Bernoulli head), chosen so
    # the small test tiles exercise a real multi-step (M=2, N=2, K=3) grid.
    batch, in_features, out_features = 32, 384, 192
    x = jax.random.normal(kx, (batch, in_features), jnp.float32)
    weight_t, bias = init_params(kp, in_features, out_features)

    logits, probs = bernoulli_layer(x, weight_t, bias, tm=16, tn=128, tk=128)
    jax.block_until_ready((logits, probs))

    # Sanity check against a plain-JAX reference (same bf16 operands, f32 accum).
    ref_logits = jnp.dot(
        x.astype(jnp.bfloat16), weight_t.astype(jnp.bfloat16),
        preferred_element_type=jnp.float32) + bias[None, :]
    ref_probs = jax.nn.sigmoid(ref_logits)
    assert jnp.allclose(logits, ref_logits, atol=2e-2, rtol=2e-2), float(
        jnp.max(jnp.abs(logits - ref_logits)))
    assert jnp.allclose(probs.astype(jnp.float32), ref_probs, atol=2e-2), float(
        jnp.max(jnp.abs(probs.astype(jnp.float32) - ref_probs)))

    print("KERNEL_OK")
</pallas_src>

<mosaic_0001>
module attributes {stable_mosaic.version = 11 : i64} {
  func.func @_bernoulli_layer_kernel(%arg0: i32, %arg1: i32, %arg2: i32, %arg3: memref<16x128xbf16, #tpu.memory_space<vmem>>, %arg4: memref<128x128xbf16, #tpu.memory_space<vmem>>, %arg5: memref<1x128xf32, #tpu.memory_space<vmem>>, %arg6: memref<16x128xf32, #tpu.memory_space<vmem>>, %arg7: memref<16x128xbf16, #tpu.memory_space<vmem>>, %arg8: memref<16x128xf32, #tpu.memory_space<vmem>>) attributes {dimension_semantics = [#tpu.dimension_semantics<parallel>, #tpu.dimension_semantics<parallel>, #tpu.dimension_semantics<arbitrary>], iteration_bounds = array<i64: 2, 2, 3>, scalar_prefetch = 0 : i64, scratch_operands = 1 : i64, tpu.core_type = #tpu.core_type<tc>, window_params = [{transform_indices = @transform_0, window_bounds = array<i64: 16, 128>}, {transform_indices = @transform_1, window_bounds = array<i64: 128, 128>}, {transform_indices = @transform_2, window_bounds = array<i64: 1, 128>}, {transform_indices = @transform_3, window_bounds = array<i64: 16, 128>}, {transform_indices = @transform_4, window_bounds = array<i64: 16, 128>}]} {
    %c0_i32 = arith.constant 0 : i32
    %0 = arith.cmpi eq, %arg2, %c0_i32 : i32
    %1 = arith.extui %0 : i1 to i32
    %c0_i32_0 = arith.constant 0 : i32
    %2 = arith.cmpi ne, %1, %c0_i32_0 : i32
    scf.if %2 {
      %cst_9 = arith.constant 0.000000e+00 : f32
      %12 = vector.broadcast %cst_9 : f32 to vector<16x128xf32>
      %c0_10 = arith.constant 0 : index
      %c0_11 = arith.constant 0 : index
      %13 = vector.load %arg8[%c0_10, %c0_11] : memref<16x128xf32, #tpu.memory_space<vmem>>, vector<16x128xf32>
      tpu.vector_store %arg8[%c0_10, %c0_11], %12 {strides = array<i32>} : memref<16x128xf32, #tpu.memory_space<vmem>>, vector<16x128xf32>,
    } else {
    }
    %c0 = arith.constant 0 : index
    %c0_1 = arith.constant 0 : index
    %3 = vector.load %arg8[%c0, %c0_1] : memref<16x128xf32, #tpu.memory_space<vmem>>, vector<16x128xf32>
    %c0_2 = arith.constant 0 : index
    %c0_3 = arith.constant 0 : index
    %4 = vector.load %arg3[%c0_2, %c0_3] : memref<16x128xbf16, #tpu.memory_space<vmem>>, vector<16x128xbf16>
    %c0_4 = arith.constant 0 : index
    %c0_5 = arith.constant 0 : index
    %5 = vector.load %arg4[%c0_4, %c0_5] : memref<128x128xbf16, #tpu.memory_space<vmem>>, vector<128x128xbf16>
    %cst = arith.constant dense<0.000000e+00> : vector<16x128xf32>
    %6 = tpu.matmul %4, %5, %cst {dimension_numbers = #tpu.dot_dimension_numbers<[1], [0], [0], [1], [0, 0, 1, 1], [], []>} : vector<16x128xbf16>, vector<128x128xbf16>, vector<16x128xf32> -> vector<16x128xf32>
    %7 = arith.addf %3, %6 : vector<16x128xf32>
    %c0_6 = arith.constant 0 : index
    %c0_7 = arith.constant 0 : index
    %8 = vector.load %arg8[%c0_6, %c0_7] : memref<16x128xf32, #tpu.memory_space<vmem>>, vector<16x128xf32>
    tpu.vector_store %arg8[%c0_6, %c0_7], %7 {strides = array<i32>} : memref<16x128xf32, #tpu.memory_space<vmem>>, vector<16x128xf32>,
    %c2_i32 = arith.constant 2 : i32
    %9 = arith.cmpi eq, %arg2, %c2_i32 : i32
    %10 = arith.extui %9 : i1 to i32
    %c0_i32_8 = arith.constant 0 : i32
    %11 = arith.cmpi ne, %10, %c0_i32_8 : i32
    scf.if %11 {
      %c0_9 = arith.constant 0 : index
      %c0_10 = arith.constant 0 : index
      %12 = vector.load %arg8[%c0_9, %c0_10] : memref<16x128xf32, #tpu.memory_space<vmem>>, vector<16x128xf32>
      %c0_11 = arith.constant 0 : index
      %c0_12 = arith.constant 0 : index
      %13 = vector.load %arg5[%c0_11, %c0_12] : memref<1x128xf32, #tpu.memory_space<vmem>>, vector<1x128xf32>
      %14 = vector.broadcast %13 : vector<1x128xf32> to vector<16x128xf32>
      %15 = arith.addf %12, %14 : vector<16x128xf32>
      %c0_13 = arith.constant 0 : index
      %c0_14 = arith.constant 0 : index
      %16 = vector.load %arg6[%c0_13, %c0_14] : memref<16x128xf32, #tpu.memory_space<vmem>>, vector<16x128xf32>
      tpu.vector_store %arg6[%c0_13, %c0_14], %15 {strides = array<i32>} : memref<16x128xf32, #tpu.memory_space<vmem>>, vector<16x128xf32>,
      %17 = arith.negf %15 : vector<16x128xf32>
      %18 = math.exp %17 : vector<16x128xf32>
      %cst_15 = arith.constant 1.000000e+00 : f32
      %19 = vector.broadcast %cst_15 : f32 to vector<16x128xf32>
      %20 = arith.addf %19, %18 : vector<16x128xf32>
      %21 = arith.divf %19, %20 : vector<16x128xf32>
      %22 = arith.truncf %21 : vector<16x128xf32> to vector<16x128xbf16>
      %c0_16 = arith.constant 0 : index
      %c0_17 = arith.constant 0 : index
      %23 = vector.load %arg7[%c0_16, %c0_17] : memref<16x128xbf16, #tpu.memory_space<vmem>>, vector<16x128xbf16>
      tpu.vector_store %arg7[%c0_16, %c0_17], %22 {strides = array<i32>} : memref<16x128xbf16, #tpu.memory_space<vmem>>, vector<16x128xbf16>,
    } else {
    }
    return
  }
  func.func @transform_0(%arg0: i32, %arg1: i32, %arg2: i32) -> (i32, i32) {
    %c0_i32 = arith.constant 0 : i32
    return %arg0, %arg2 : i32, i32
  }
  func.func @transform_1(%arg0: i32, %arg1: i32, %arg2: i32) -> (i32, i32) {
    %c0_i32 = arith.constant 0 : i32
    return %arg2, %arg1 : i32, i32
  }
  func.func @transform_2(%arg0: i32, %arg1: i32, %arg2: i32) -> (i32, i32) {
    %c0_i32 = arith.constant 0 : i32
    %c0_i32_0 = arith.constant 0 : i32
    return %c0_i32, %arg1 : i32, i32
  }
  func.func @transform_3(%arg0: i32, %arg1: i32, %arg2: i32) -> (i32, i32) {
    %c0_i32 = arith.constant 0 : i32
    return %arg0, %arg1 : i32, i32
  }
  func.func @transform_4(%arg0: i32, %arg1: i32, %arg2: i32) -> (i32, i32) {
    %c0_i32 = arith.constant 0 : i32
    return %arg0, %arg1 : i32, i32
  }
}

</mosaic_0001>

<llo_original>
// kernel: tpu_custom_call.1
$region0: #{tpu_custom_call.1}
  #allocation0 [shape = 'u32[]', space=smem, size = 0x4, offset = 0x4, fixed_abs, tag = 'smem constant byte address 0x4 - core index']
  #allocation1 [shape = 'u32[144,128]{1,0:T(1,128)}', space=vmem, size = 0x12000, scoped, tag = 'internal scratch']
  #allocation2 [shape = 'f32[16,128]{1,0:T(8,128)}', space=vmem, size = 0x2000, scoped, tag = 'scratch operand']
  %s0 = inlined_call_operand.hbm [shape: bf16[32,384], index: 0, kind: input, shape index: {}]
  %s1 = inlined_call_operand.hbm [shape: bf16[384,256], index: 1, kind: input, shape index: {}]
  %s2 = inlined_call_operand.vmem [shape: f32[1,256], index: 2, kind: input, shape index: {}]
  %s3 = inlined_call_operand.hbm [shape: f32[32,256], index: 3, kind: output, shape index: {0}]
  %s4 = inlined_call_operand.hbm [shape: bf16[32,256], index: 4, kind: output, shape index: {1}]
  %5 = xla_tuple %s3, %s4
  %s6 = sld [smem:[#allocation0]]
  $region69: #{tpu_custom_call.1} parent=0
    _
  %s8 = ssub.s32 1, %s6
  %s9 = scalar_select 0, %s8, %s6
  $region1: #{tpu_custom_call.1} parent=0
    #allocation3 [shape = 'u8[8192]{0}', space=vmem, size = 0x2000, scoped, tag = 'input window, operand 0']
    #allocation4 [shape = 's32[2]{0}', space=sflag, size = 0x8, scoped, tag = 'scoped memory for tpu_custom_call.1']
    #allocation5 [shape = 's32[2]{0}', space=sflag, size = 0x8, scoped, tag = 'scoped memory for tpu_custom_call.1']
    #allocation6 [shape = 'u8[65536]{0}', space=vmem, size = 0x10000, scoped, tag = 'input window, operand 1']
    #allocation7 [shape = 's32[2]{0}', space=sflag, size = 0x8, scoped, tag = 'scoped memory for tpu_custom_call.1']
    #allocation8 [shape = 'u8[16384]{0}', space=vmem, size = 0x4000, scoped, tag = 'output window, operand 0']
    #allocation9 [shape = 'u8[8192]{0}', space=vmem, size = 0x2000, scoped, tag = 'output window, operand 1']
    #allocation10 [shape = 's32[2]{0}', space=sflag, size = 0x8, scoped, tag = 'scoped memory for tpu_custom_call.1']
    %10 = vsyncpa [#allocation4], 0
    %s11 = scalar_lea.sflag [#allocation4], 1
    %12 = vsyncpa %s11, 0
    %13 = vsyncpa [#allocation7], 0
    %s14 = scalar_lea.sflag [#allocation7], 1
    %15 = vsyncpa %s14, 0
    %16 = vsyncpa [#allocation5], 0
    %s17 = scalar_lea.sflag [#allocation5], 1
    %18 = vsyncpa %s17, 0
    %19 = vsyncpa [#allocation10], 0
    %s20 = scalar_lea.sflag [#allocation10], 1
    %21 = vsyncpa %s20, 0
    loop: start=0, step=1, limit=14
    $region2: #{tpu_custom_call.1} parent=1 // loop_pre_header
      _
    $region3: #{tpu_custom_call.1} parent=1 // loop_header
      %s23 = sphi 0, %s27
      %p24 = scmp.ge.s32.totalorder %s23, 14
      %s30 = sphi 0, %s49
      %s31 = sphi 0, %s45
      %s32 = sphi 0, %s41
      %s33 = sphi 0, %s30
      %s34 = sphi 0, %s31
      %s35 = sphi 0, %s32
      %s36 = sphi 0, %s33
      %s37 = sphi 0, %s34
      %s38 = sphi 0, %s35
      %s54 = sphi 0, %s56
      %s57 = sphi 0, %s54
      %s58 = sphi 0, %s57
      %s74 = sphi 0, %s58
      %s82 = sphi 0, %s84
      %s85 = sphi 0, %s82
      %s86 = sphi 0, %s85
      %s102 = sphi 0, %s86
      %s108 = sphi 0, %s110
      %s111 = sphi 0, %s108
      %s112 = sphi 0, %s111
      %s128 = sphi 0, %s112
      %s136 = sphi 0, %s138
      %s139 = sphi 0, %s136
      %s140 = sphi 0, %s139
      %s156 = sphi 0, %s140
      %s164 = sphi 0, %s166
      %s167 = sphi 0, %s164
      %s168 = sphi 0, %s167
      %s184 = sphi 0, %s168
    $region4: #{tpu_custom_call.1} parent=1 // loop_header_branch
      %26 = sbr.rel (%p24) target = $region8
    $region5: #{tpu_custom_call.1} parent=1 // loop_body
      %s28 = ssub.s32 %s23, 1
      %s29 = ssub.s32 %s23, 2
      %s39 = sadd.s32 1, %s32
      %p40 = scmp.ge.s32.totalorder %s39, 3
      %s41 = scalar_select %p40, 0, %s39
      %s42 = sadd.s32 1, %s31
      %s43 = scalar_select %p40, %s42, %s31
      %p44 = scmp.ge.s32.totalorder %s43, 2
      %s45 = scalar_select %p44, 0, %s43
      %s46 = sadd.s32 1, %s30
      %s47 = scalar_select %p44, %s46, %s30
      %p48 = scmp.ge.s32.totalorder %s47, 2
      %s49 = scalar_select %p48, 0, %s47
      %s50 = ssub.s32 %s30, %s49
      %s51 = ssub.s32 %s32, %s41
      %s52 = sor.u32 %s50, %s51
      %p53 = scmp.eq.s32.totalorder %s52, 0
      %s55 = sadd.s32 %s54, 1
      %s56 = scalar_select %p53, %s54, %s55
      %p59 = pneg %p53
      %p60 = scmp.eq.s32.totalorder %s23, 11
      %p61 = por %p59, %p60
      %p62 = scmp.ne.s32.totalorder %s54, %s57
      %p63 = scmp.eq.s32.totalorder %s23, 0
      %p64 = por %p62, %p63
      %p65 = scmp.ne.s32.totalorder %s54, %s57
      %p66 = scmp.eq.s32.totalorder %s28, 11
      %p67 = por %p65, %p66
      %p68 = scmp.ne.s32.totalorder %s57, %s58
      %p69 = scmp.eq.s32.totalorder %s28, 0
      %p70 = por %p68, %p69
      %p71 = scmp.ne.s32.totalorder %s57, %s58
      %p72 = scmp.eq.s32.totalorder %s29, 11
      %p73 = por %p71, %p72
      %p75 = scmp.ne.s32.totalorder %s58, %s74
      %p76 = scmp.eq.s32.totalorder %s29, 0
      %p77 = por %p75, %p76
      %s78 = ssub.s32 %s32, %s41
      %s79 = ssub.s32 %s31, %s45
      %s80 = sor.u32 %s78, %s79
      %p81 = scmp.eq.s32.totalorder %s80, 0
      %s83 = sadd.s32 %s82, 1
      %s84 = scalar_select %p81, %s82, %s83
      %p87 = pneg %p81
      %p88 = scmp.eq.s32.totalorder %s23, 11
      %p89 = por %p87, %p88
      %p90 = scmp.ne.s32.totalorder %s82, %s85
      %p91 = scmp.eq.s32.totalorder %s23, 0
      %p92 = por %p90, %p91
      %p93 = scmp.ne.s32.totalorder %s82, %s85
      %p94 = scmp.eq.s32.totalorder %s28, 11
      %p95 = por %p93, %p94
      %p96 = scmp.ne.s32.totalorder %s85, %s86
      %p97 = scmp.eq.s32.totalorder %s28, 0
      %p98 = por %p96, %p97
      %p99 = scmp.ne.s32.totalorder %s85, %s86
      %p100 = scmp.eq.s32.totalorder %s29, 11
      %p101 = por %p99, %p100
      %p103 = scmp.ne.s32.totalorder %s86, %s102
      %p104 = scmp.eq.s32.totalorder %s29, 0
      %p105 = por %p103, %p104
      %s106 = ssub.s32 %s31, %s45
      %p107 = scmp.eq.s32.totalorder %s106, 0
      %s109 = sadd.s32 %s108, 1
      %s110 = scalar_select %p107, %s108, %s109
      %p113 = pneg %p107
      %p114 = scmp.eq.s32.totalorder %s23, 11
      %p115 = por %p113, %p114
      %p116 = scmp.ne.s32.totalorder %s108, %s111
      %p117 = scmp.eq.s32.totalorder %s23, 0
      %p118 = por %p116, %p117
      %p119 = scmp.ne.s32.totalorder %s108, %s111
      %p120 = scmp.eq.s32.totalorder %s28, 11
      %p121 = por %p119, %p120
      %p122 = scmp.ne.s32.totalorder %s111, %s112
      %p123 = scmp.eq.s32.totalorder %s28, 0
      %p124 = por %p122, %p123
      %p125 = scmp.ne.s32.totalorder %s111, %s112
      %p126 = scmp.eq.s32.totalorder %s29, 11
      %p127 = por %p125, %p126
      %p129 = scmp.ne.s32.totalorder %s112, %s128
      %p130 = scmp.eq.s32.totalorder %s29, 0
      %p131 = por %p129, %p130
      %s132 = ssub.s32 %s30, %s49
      %s133 = ssub.s32 %s31, %s45
      %s134 = sor.u32 %s132, %s133
      %p135 = scmp.eq.s32.totalorder %s134, 0
      %s137 = sadd.s32 %s136, 1
      %s138 = scalar_select %p135, %s136, %s137
      %p141 = pneg %p135
      %p142 = scmp.eq.s32.totalorder %s23, 11
      %p143 = por %p141, %p142
      %p144 = scmp.ne.s32.totalorder %s136, %s139
      %p145 = scmp.eq.s32.totalorder %s23, 0
      %p146 = por %p144, %p145
      %p147 = scmp.ne.s32.totalorder %s136, %s139
      %p148 = scmp.eq.s32.totalorder %s28, 11
      %p149 = por %p147, %p148
      %p150 = scmp.ne.s32.totalorder %s139, %s140
      %p151 = scmp.eq.s32.totalorder %s28, 0
      %p152 = por %p150, %p151
      %p153 = scmp.ne.s32.totalorder %s139, %s140
      %p154 = scmp.eq.s32.totalorder %s29, 11
      %p155 = por %p153, %p154
      %p157 = scmp.ne.s32.totalorder %s140, %s156
      %p158 = scmp.eq.s32.totalorder %s29, 0
      %p159 = por %p157, %p158
      %s160 = ssub.s32 %s30, %s49
      %s161 = ssub.s32 %s31, %s45
      %s162 = sor.u32 %s160, %s161
      %p163 = scmp.eq.s32.totalorder %s162, 0
      %s165 = sadd.s32 %s164, 1
      %s166 = scalar_select %p163, %s164, %s165
      %p169 = pneg %p163
      %p170 = scmp.eq.s32.totalorder %s23, 11
      %p171 = por %p169, %p170
      %p172 = scmp.ne.s32.totalorder %s164, %s167
      %p173 = scmp.eq.s32.totalorder %s23, 0
      %p174 = por %p172, %p173
      %p175 = scmp.ne.s32.totalorder %s164, %s167
      %p176 = scmp.eq.s32.totalorder %s28, 11
      %p177 = por %p175, %p176
      %p178 = scmp.ne.s32.totalorder %s167, %s168
      %p179 = scmp.eq.s32.totalorder %s28, 0
      %p180 = por %p178, %p179
      %p181 = scmp.ne.s32.totalorder %s167, %s168
      %p182 = scmp.eq.s32.totalorder %s29, 11
      %p183 = por %p181, %p182
      %p185 = scmp.ne.s32.totalorder %s168, %s184
      %p186 = scmp.eq.s32.totalorder %s29, 0
      %p187 = por %p185, %p186
      %p188 = scmp.le.s32.totalorder 1, %s23
      %p189 = scmp.lt.s32.totalorder %s23, 13
      %p190 = pnand %p188, %p189
      %p191 = pneg %p190
      // Predicated region
      $region9: #{tpu_custom_call.1} parent=5 // pred_check
        _
      $region10: #{tpu_custom_call.1} parent=5 // pred_check_branch
        %193 = sbr.rel (%p190) target = $region12
      $region11: #{tpu_custom_call.1} parent=5 // pred_region
        %s194 = ssub.s32 %s23, 1
      $region12: #{tpu_custom_call.1} parent=5 // pred_fallthru
        _
      %p195 = scmp.lt.s32.totalorder %s23, 12
      // Predicated region
      $region13: #{tpu_custom_call.1} parent=5 // pred_check
        %p196 = pneg %p195
      $region14: #{tpu_custom_call.1} parent=5 // pred_check_branch
        %198 = sbr.rel (%p196) target = $region16
      $region15: #{tpu_custom_call.1} parent=5 // pred_region
        // Predicated region
        $region17: #{tpu_custom_call.1} parent=15 // pred_check
          %p199 = pneg %p64
        $region18: #{tpu_custom_call.1} parent=15 // pred_check_branch
          %201 = sbr.rel (%p199) target = $region20
        $region19: #{tpu_custom_call.1} parent=15 // pred_region
          %s202 = sand.u32 %s54, 1
          %s203 = scalar_lea.sflag [#allocation4], %s202
          %s204 = sand.u32 %s54, 1
          %s205 = smul.addr %s204, 8
          %s206 = scalar_lea.vmem [#allocation3], %s205
          %s207 = smul.u32 2, %s30
          %s209 = ssub.s32 128, 128
          %210 = vsyncadd %s203, %s209
          %s211 = smul.addr %s207, 3
          %s212 = sadd.s32 %s32, %s211
          %s213 = smul.addr %s212, 64
          %s214 = scalar_lea.hbm %s0, %s213
          %s215 = sshll.u32 %s206, 4
          %s216 = int_to_ptr.vmem [resolvable:$true] %s215
          %221 = dma.hbm_to_vmem [thread:$0]  %s214, 128, %s216, %s203, 192, 64, 4
        $region20: #{tpu_custom_call.1} parent=15 // pred_fallthru
          _
        // Predicated region
        $region21: #{tpu_custom_call.1} parent=15 // pred_check
          %p222 = pneg %p92
        $region22: #{tpu_custom_call.1} parent=15 // pred_check_branch
          %224 = sbr.rel (%p222) target = $region24
        $region23: #{tpu_custom_call.1} parent=15 // pred_region
          %s225 = sand.u32 %s82, 1
          %s226 = scalar_lea.sflag [#allocation7], %s225
          %s227 = sand.u32 %s82, 1
          %s228 = smul.addr %s227, 64
          %s229 = scalar_lea.vmem [#allocation6], %s228
          %s230 = smul.u32 16, %s32
          %s232 = ssub.s32 1024, 1024
          %233 = vsyncadd %s226, %s232
          %s234 = smul.addr %s230, 2
          %s235 = sadd.s32 %s31, %s234
          %s236 = smul.addr %s235, 64
          %s237 = scalar_lea.hbm %s1, %s236
          %s238 = sshll.u32 %s229, 4
          %s239 = int_to_ptr.vmem [resolvable:$true] %s238
          %244 = dma.hbm_to_vmem [thread:$0]  %s237, 1024, %s239, %s226, 128, 64, 4
        $region24: #{tpu_custom_call.1} parent=15 // pred_fallthru
          _
        // Predicated region
        $region25: #{tpu_custom_call.1} parent=15 // pred_check
          %p245 = pneg %p118
        $region26: #{tpu_custom_call.1} parent=15 // pred_check_branch
          %247 = sbr.rel (%p245) target = $region28
        $region27: #{tpu_custom_call.1} parent=15 // pred_region
          %p248 = scmp.lt.s32.totalorder %s31, 1
          %s249 = scalar_select %p248, %s31, 1
          %s250 = scalar_lea.vmem %s2, %s249
        $region28: #{tpu_custom_call.1} parent=15 // pred_fallthru
          _
      $region16: #{tpu_custom_call.1} parent=5 // pred_fallthru
        _
      %p251 = scmp.le.s32.totalorder 1, %s23
      %p252 = scmp.lt.s32.totalorder %s23, 13
      %p253 = pnand %p251, %p252
      %p254 = pneg %p253
      // Predicated region
      $region29: #{tpu_custom_call.1} parent=5 // pred_check
        _
      $region30: #{tpu_custom_call.1} parent=5 // pred_check_branch
        %256 = sbr.rel (%p253) target = $region32
      $region31: #{tpu_custom_call.1} parent=5 // pred_region
        %s257 = ssub.s32 %s23, 1
        %s258 = sand.u32 %s57, 1
        %s259 = scalar_lea.sflag [#allocation4], %s258
        %s260 = sand.u32 %s57, 1
        %s261 = smul.addr %s260, 8
        %s262 = scalar_lea.vmem [#allocation3], %s261
        // Predicated region
        $region33: #{tpu_custom_call.1} parent=31 // pred_check
          %p263 = pneg %p70
        $region34: #{tpu_custom_call.1} parent=31 // pred_check_branch
          %265 = sbr.rel (%p263) target = $region36
        $region35: #{tpu_custom_call.1} parent=31 // pred_region
          %266 = dma.done %s259, 128
        $region36: #{tpu_custom_call.1} parent=31 // pred_fallthru
          _
        %s267 = sand.u32 %s85, 1
        %s268 = scalar_lea.sflag [#allocation7], %s267
        %s269 = sand.u32 %s85, 1
        %s270 = smul.addr %s269, 64
        %s271 = scalar_lea.vmem [#allocation6], %s270
        // Predicated region
        $region37: #{tpu_custom_call.1} parent=31 // pred_check
          %p272 = pneg %p98
        $region38: #{tpu_custom_call.1} parent=31 // pred_check_branch
          %274 = sbr.rel (%p272) target = $region40
        $region39: #{tpu_custom_call.1} parent=31 // pred_region
          %275 = dma.done %s268, 1024
        $region40: #{tpu_custom_call.1} parent=31 // pred_fallthru
          _
        %s276 = sand.u32 %s57, 1
        %s277 = scalar_lea.sflag [#allocation4], %s276
        %s278 = sand.u32 %s57, 1
        %s279 = smul.addr %s278, 8
        %s280 = scalar_lea.vmem [#allocation3], %s279
        %p281 = pneg %p70
        %p282 = pneg %p67
        %s283 = sand.u32 %s85, 1
        %s284 = scalar_lea.sflag [#allocation7], %s283
        %s285 = sand.u32 %s85, 1
        %s286 = smul.addr %s285, 64
        %s287 = scalar_lea.vmem [#allocation6], %s286
        %p288 = pneg %p98
        %p289 = pneg %p95
        %p290 = scmp.lt.s32.totalorder %s34, 1
        %s291 = scalar_select %p290, %s34, 1
        %s292 = scalar_lea.vmem %s2, %s291
        %p293 = pneg %p124
        %p294 = pneg %p121
        %p295 = pneg %p152
        %p296 = pneg %p149
        %s297 = sand.u32 %s139, 1
        %s298 = scalar_lea.sflag [#allocation5], %s297
        %s299 = sand.u32 %s139, 1
        %s300 = smul.addr %s299, 16
        %s301 = scalar_lea.vmem [#allocation8], %s300
        %p302 = pneg %p180
        %p303 = pneg %p177
        %s304 = sand.u32 %s167, 1
        %s305 = scalar_lea.sflag [#allocation10], %s304
        %s306 = sand.u32 %s167, 1
        %s307 = smul.addr %s306, 8
        %s308 = scalar_lea.vmem [#allocation9], %s307
        %s309 = smul.u32 2, %s33
        %s310 = smul.u32 16, %s35
        %p311 = scmp.lt.s32.totalorder %s34, 1
        %s312 = scalar_select %p311, %s34, 1
        %s313 = scalar_lea.vmem %s2, %s312
        %s314 = smul.u32 2, %s33
        %s315 = smul.u32 2, %s33
        %p317 = scmp.eq.s32.totalorder %s35, 0
        // Predicated region
        $region41: #{tpu_custom_call.1} parent=31 // pred_check
          %p318 = pneg %p317
        $region42: #{tpu_custom_call.1} parent=31 // pred_check_branch
          %320 = sbr.rel (%p318) target = $region44
        $region43: #{tpu_custom_call.1} parent=31 // pred_region
          %321 = vst [vmem:[#allocation2] sm:$0xff] 0.0
          %322 = vst [vmem:[#allocation2 + $0x8] sm:$0xff] 0.0
        $region44: #{tpu_custom_call.1} parent=31 // pred_fallthru
          _
        %v323 = vld [vmem:[#allocation2] sm:$0xff]
        %v324 = vld [vmem:[#allocation2 + $0x8] sm:$0xff]
        %v325 = vld [vmem:[%s262] sm:$0xf]
        %v326 = vld [vmem:[%s262 + $0x4] sm:$0xf]
        %v327 = vld [vmem:[%s271] sm:$0xf]
        %v328 = vld [vmem:[%s271 + $0x4] sm:$0xf]
        %v329 = vld [vmem:[%s271 + $0x8] sm:$0xf]
        %v330 = vld [vmem:[%s271 + $0xc] sm:$0xf]
        %v331 = vld [vmem:[%s271 + $0x10] sm:$0xf]
        %v332 = vld [vmem:[%s271 + $0x14] sm:$0xf]
        %v333 = vld [vmem:[%s271 + $0x18] sm:$0xf]
        %v334 = vld [vmem:[%s271 + $0x1c] sm:$0xf]
        %v335 = vld [vmem:[%s271 + $0x20] sm:$0xf]
        %v336 = vld [vmem:[%s271 + $0x24] sm:$0xf]
        %v337 = vld [vmem:[%s271 + $0x28] sm:$0xf]
        %v338 = vld [vmem:[%s271 + $0x2c] sm:$0xf]
        %v339 = vld [vmem:[%s271 + $0x30] sm:$0xf]
        %v340 = vld [vmem:[%s271 + $0x34] sm:$0xf]
        %v341 = vld [vmem:[%s271 + $0x38] sm:$0xf]
        %v342 = vld [vmem:[%s271 + $0x3c] sm:$0xf]
        %v345 = vunpack.c.l.b16 %v325
        %v346 = vunpack.c.l.b16 %v326
        %v347 = vpack.c.b16 %v346, %v345
        %v365 = vunpack.c.l.b16 %v327
        %v366 = vunpack.c.l.b16 %v328
        %v367 = vunpack.c.l.b16 %v329
        %v368 = vunpack.c.l.b16 %v330
        %v369 = vunpack.c.l.b16 %v331
        %v370 = vunpack.c.l.b16 %v332
        %v371 = vunpack.c.l.b16 %v333
        %v372 = vunpack.c.l.b16 %v334
        %v373 = vunpack.c.l.b16 %v335
        %v374 = vunpack.c.l.b16 %v336
        %v375 = vunpack.c.l.b16 %v337
        %v376 = vunpack.c.l.b16 %v338
        %v377 = vunpack.c.l.b16 %v339
        %v378 = vunpack.c.l.b16 %v340
        %v379 = vunpack.c.l.b16 %v341
        %v380 = vunpack.c.l.b16 %v342
        %v381 = vpack.c.b16 %v366, %v365
        %v382 = vpack.c.b16 %v368, %v367
        %v383 = vpack.c.b16 %v370, %v369
        %v384 = vpack.c.b16 %v372, %v371
        %v385 = vpack.c.b16 %v374, %v373
        %v386 = vpack.c.b16 %v376, %v375
        %v387 = vpack.c.b16 %v378, %v377
        %v388 = vpack.c.b16 %v380, %v379
        %397 = vmatprep.subr.bf16.mxu0 0
        %398 = vmatpush1.bf16.msra.mxu0 %v388
        %399 = vmatprep.subr.bf16.mxu0 0
        %400 = vmatpush1.bf16.msra.mxu0 %v387
        %401 = vmatprep.subr.bf16.mxu0 0
        %402 = vmatpush1.bf16.msra.mxu0 %v386
        %403 = vmatprep.subr.bf16.mxu0 0
        %404 = vmatpush1.bf16.msra.mxu0 %v385
        %405 = vmatprep.subr.bf16.mxu0 0
        %406 = vmatpush1.bf16.msra.mxu0 %v384
        %407 = vmatprep.subr.bf16.mxu0 0
        %408 = vmatpush1.bf16.msra.mxu0 %v383
        %409 = vmatprep.subr.bf16.mxu0 0
        %410 = vmatpush1.bf16.msra.mxu0 %v382
        %411 = vmatprep.subr.bf16.mxu0 0
        %412 = vmatpush1.bf16.msra.mxu0 %v381
        %413 = vmatprep.subr.bf16.mxu0 0
        %414 = vmatpush2.bf16.msra.mxu0 0
        %415 = vmatprep.subr.bf16.mxu0 0
        %416 = vmatpush2.bf16.msra.mxu0 0
        %417 = vmatprep.subr.bf16.mxu0 0
        %418 = vmatpush2.bf16.msra.mxu0 0
        %419 = vmatprep.subr.bf16.mxu0 0
        %420 = vmatpush2.bf16.msra.mxu0 0
        %421 = vmatprep.subr.bf16.mxu0 0
        %422 = vmatpush2.bf16.msra.mxu0 0
        %423 = vmatprep.subr.bf16.mxu0 0
        %424 = vmatpush2.bf16.msra.mxu0 0
        %425 = vmatprep.subr.bf16.mxu0 0
        %426 = vmatpush2.bf16.msra.mxu0 0
        %427 = vmatprep.subr.bf16.mxu0 0
        %428 = vmatpush2.bf16.msra.mxu0 0
        %429 = vmatprep.mubr.bf16.mxu0 0
        %430 = vmatmul.mubr.bf16.gmra.mxu0 %v347
        %v431 = vpop.f32.mrf.mxu0
        %v432 = vadd.f32 0.0, %v431
        %v433 = vpop.f32.mrf.mxu0
        %v434 = vpop.f32.mrf.mxu0
        %v435 = vadd.f32 0.0, %v434
        %v436 = vpop.f32.mrf.mxu0
        %437 = vdwg.mxu0
        %v438 = vadd.f32 %v323, %v432
        %v439 = vadd.f32 %v324, %v435
        %440 = vst [vmem:[#allocation2] sm:$0xff] %v438
        %441 = vst [vmem:[#allocation2 + $0x8] sm:$0xff] %v439
        %p442 = scmp.eq.s32.totalorder %s35, 2
        // Predicated region
        $region45: #{tpu_custom_call.1} parent=31 // pred_check
          %p443 = pneg %p442
        $region46: #{tpu_custom_call.1} parent=31 // pred_check_branch
          %445 = sbr.rel (%p443) target = $region48
        $region47: #{tpu_custom_call.1} parent=31 // pred_region
          %v446 = vld [vmem:[#allocation2] sm:$0xff]
          %v447 = vld [vmem:[#allocation2 + $0x8] sm:$0xff]
          %v448 = vld [vmem:[%s313] sm:$0x1]
          %v450 = vlaneseq
          %v451 = vshrl.u32 %v450, 7
          %v452 = vsub.s32 0, %v451
          %v453 = vrot.slane %v448, %v452
          %v455 = vadd.f32 %v446, %v453
          %v456 = vadd.f32 %v447, %v453
          %457 = vst [vmem:[%s301] sm:$0xff] %v455
          %458 = vst [vmem:[%s301 + $0x8] sm:$0xff] %v456
          %v459 = vxor.u32 %v455, 2147483648
          %v460 = vxor.u32 %v456, 2147483648
          %v461 = vmul.f32 %v459, 1.442695
          %v462 = vpow.pop %v461
          %v463 = vmul.f32 %v460, 1.442695
          %v464 = vpow.pop %v463
          %v465 = vadd.f32 %v462, 1.0
          %v466 = vadd.f32 %v464, 1.0
          %v467 = vrcp.pop %v465
          %v468 = vmul.f32 1.0, %v467
          %v469 = vrcp.pop %v466
          %v470 = vmul.f32 1.0, %v469
          %v471 = vpack.c.bf16 %v470, %v468
          %v473 = vunpack.c.l.b16 %v471
          %v474 = vunpack.c.h.b16 %v471
          %v475 = vpack.c.b16 %v473, %v473
          %v476 = vpack.c.b16 %v474, %v474
          %479 = vst [vmem:[%s308] sm:$0xf] %v475
          %480 = vst [vmem:[%s308 + $0x4] sm:$0xf] %v476
        $region48: #{tpu_custom_call.1} parent=31 // pred_fallthru
          _
        %s481 = sand.u32 %s139, 1
        %s482 = scalar_lea.sflag [#allocation5], %s481
        %s483 = sand.u32 %s139, 1
        %s484 = smul.addr %s483, 16
        %s485 = scalar_lea.vmem [#allocation8], %s484
        %s486 = sand.u32 %s167, 1
        %s487 = scalar_lea.sflag [#allocation10], %s486
        %s488 = sand.u32 %s167, 1
        %s489 = smul.addr %s488, 8
        %s490 = scalar_lea.vmem [#allocation9], %s489
        // Predicated region
        $region49: #{tpu_custom_call.1} parent=31 // pred_check
          %p491 = pneg %p149
        $region50: #{tpu_custom_call.1} parent=31 // pred_check_branch
          %493 = sbr.rel (%p491) target = $region52
        $region51: #{tpu_custom_call.1} parent=31 // pred_region
          %s494 = smul.u32 2, %s33
          %s496 = ssub.s32 256, 256
          %497 = vsyncadd %s482, %s496
          %s498 = smul.addr %s494, 2
          %s499 = sadd.s32 %s34, %s498
          %s500 = smul.addr %s499, 128
          %s501 = scalar_lea.hbm %s3, %s500
          %s502 = sshll.u32 %s485, 4
          %s503 = int_to_ptr.vmem [resolvable:$true] %s502
          %508 = dma.vmem_to_hbm [thread:$0]  %s503, 256, %s501, %s482, 128, 256, 8
        $region52: #{tpu_custom_call.1} parent=31 // pred_fallthru
          _
        // Predicated region
        $region53: #{tpu_custom_call.1} parent=31 // pred_check
          %p509 = pneg %p177
        $region54: #{tpu_custom_call.1} parent=31 // pred_check_branch
          %511 = sbr.rel (%p509) target = $region56
        $region55: #{tpu_custom_call.1} parent=31 // pred_region
          %s512 = smul.u32 2, %s33
          %s514 = ssub.s32 128, 128
          %515 = vsyncadd %s487, %s514
          %s516 = smul.addr %s512, 2
          %s517 = sadd.s32 %s34, %s516
          %s518 = smul.addr %s517, 64
          %s519 = scalar_lea.hbm %s4, %s518
          %s520 = sshll.u32 %s490, 4
          %s521 = int_to_ptr.vmem [resolvable:$true] %s520
          %526 = dma.vmem_to_hbm [thread:$0]  %s521, 128, %s519, %s487, 64, 128, 4
        $region56: #{tpu_custom_call.1} parent=31 // pred_fallthru
          _
      $region32: #{tpu_custom_call.1} parent=5 // pred_fallthru
        _
      %p527 = scmp.le.s32.totalorder 2, %s23
      // Predicated region
      $region57: #{tpu_custom_call.1} parent=5 // pred_check
        %p528 = pneg %p527
      $region58: #{tpu_custom_call.1} parent=5 // pred_check_branch
        %530 = sbr.rel (%p528) target = $region60
      $region59: #{tpu_custom_call.1} parent=5 // pred_region
        %s531 = ssub.s32 %s23, 2
        // Predicated region
        $region61: #{tpu_custom_call.1} parent=59 // pred_check
          %p532 = pneg %p155
        $region62: #{tpu_custom_call.1} parent=59 // pred_check_branch
          %534 = sbr.rel (%p532) target = $region64
        $region63: #{tpu_custom_call.1} parent=59 // pred_region
          %s535 = sand.u32 %s140, 1
          %s536 = scalar_lea.sflag [#allocation5], %s535
          %s537 = sand.u32 %s140, 1
          %s538 = smul.addr %s537, 16
          %s539 = scalar_lea.vmem [#allocation8], %s538
          %540 = dma.done %s536, 256
        $region64: #{tpu_custom_call.1} parent=59 // pred_fallthru
          _
        // Predicated region
        $region65: #{tpu_custom_call.1} parent=59 // pred_check
          %p541 = pneg %p183
        $region66: #{tpu_custom_call.1} parent=59 // pred_check_branch
          %543 = sbr.rel (%p541) target = $region68
        $region67: #{tpu_custom_call.1} parent=59 // pred_region
          %s544 = sand.u32 %s168, 1
          %s545 = scalar_lea.sflag [#allocation10], %s544
          %s546 = sand.u32 %s168, 1
          %s547 = smul.addr %s546, 8
          %s548 = scalar_lea.vmem [#allocation9], %s547
          %549 = dma.done %s545, 128
        $region68: #{tpu_custom_call.1} parent=59 // pred_fallthru
          _
      $region60: #{tpu_custom_call.1} parent=5 // pred_fallthru
        _
    $region6: #{tpu_custom_call.1} parent=1 // loop_footer
      %s27 = sadd.s32 1, %s23
    $region7: #{tpu_custom_call.1} parent=1 // loop_footer_branch
      %22 = sbr.rel target = $region3
    $region8: #{tpu_custom_call.1} parent=1 // loop_exit
      _
    %550 = vsyncpa [#allocation4], 1
    %s551 = scalar_lea.sflag [#allocation4], 1
    %552 = vsyncpa %s551, 1
    %553 = vsyncpa [#allocation7], 1
    %s554 = scalar_lea.sflag [#allocation7], 1
    %555 = vsyncpa %s554, 1
    %556 = vsyncpa [#allocation5], 1
    %s557 = scalar_lea.sflag [#allocation5], 1
    %558 = vsyncpa %s557, 1
    %559 = vsyncpa [#allocation10], 1
    %s560 = scalar_lea.sflag [#allocation10], 1
    %561 = vsyncpa %s560, 1

</llo_original>
